<compile_context>
chip_gen: v6e
topology: v6e:2x2x1
jax: 0.10.0
libtpu: 0.0.40
codegen_flags: <defaults>
</compile_context>

<pallas_src>
import functools

import jax
import jax.numpy as jnp
from jax.experimental import pallas as pl
from jax.experimental.pallas import tpu as pltpu

LANE = 128
SUBLANE_BF16 = 16  # bf16 vregs pack 16 sublanes


def _round_up(x, m):
    return ((x + m - 1) // m) * m


def _linear_head_kernel(x_ref, w_ref, b_ref, o_ref):
    # x_ref: (TB, E) f32, w_ref: (E, C_pad) bf16, b_ref: (1, C_pad) f32,
    # o_ref: (TB, C_pad) bf16
    x_bf16 = x_ref[...].astype(jnp.bfloat16)  # in-kernel cast (VPU, hidden under DMA)
    acc = jnp.dot(x_bf16, w_ref[...], preferred_element_type=jnp.float32)
    o_ref[...] = (acc + b_ref[...]).astype(o_ref.dtype)


def linear_head_pallas(x_embed, weight_t_pad, bias_pad, *, num_classes, block_b=2048):
    """y = x_embed @ W^T + b.

    x_embed     : (B, E) float (streamed in native dtype, cast in-kernel)
    weight_t_pad: (E, C_pad) bf16   -- fc.weight transposed + zero-padded to 128n
    bias_pad    : (1, C_pad) f32    -- fc.bias zero-padded
    returns     : (B, num_classes) f32
    """
    B, E = x_embed.shape
    E2, C_pad = weight_t_pad.shape
    assert E == E2 and C_pad % LANE == 0

    # Batch tile: big enough to amortize the ~0.35us per-step pipeline overhead,
    # small enough to keep >= 2 "parallel" grid steps (v7x has 2 TCs sharing the
    # grid along parallel axes) whenever B allows; full bf16 sublane groups.
    TB = min(block_b, _round_up(pl.cdiv(B, 2), SUBLANE_BF16))
    TB = max(TB, SUBLANE_BF16)
    grid = pl.cdiv(B, TB)  # ragged tail handled by Pallas; rows are independent

    x_bytes = x_embed.dtype.itemsize
    cost = pl.CostEstimate(
        flops=2 * B * E * C_pad,
        transcendentals=0,
        bytes_accessed=(B * E * x_bytes        # x (native dtype, typically f32)
                        + E * C_pad * 2        # weight (bf16, VMEM-resident)
                        + C_pad * 4            # bias (f32)
                        + B * C_pad * 2),      # out (bf16)
    )

    out = pl.pallas_call(
        _linear_head_kernel,
        out_shape=jax.ShapeDtypeStruct((B, C_pad), jnp.bfloat16),
        grid_spec=pl.GridSpec(
            grid=(grid,),
            in_specs=[
                pl.BlockSpec((TB, E), lambda i: (i, 0)),      # streamed x tile
                pl.BlockSpec((E, C_pad), lambda i: (0, 0)),   # VMEM-resident weight
                pl.BlockSpec((1, C_pad), lambda i: (0, 0)),   # VMEM-resident bias
            ],
            out_specs=pl.BlockSpec((TB, C_pad), lambda i: (i, 0)),
        ),
        compiler_params=pltpu.CompilerParams(
            dimension_semantics=("parallel",),
        ),
        cost_estimate=cost,
    )(x_embed, weight_t_pad, bias_pad)

    # Slice off the class-dim padding; upcast the small result to f32 logits.
    return out[:, :num_classes].astype(jnp.float32)


class ClassifierPallas:
    """JAX/Pallas counterpart of Classifier(num_classes, head='linear')."""

    def __init__(self, num_classes, embedding_size=1024, key=None,
                 block_b=2048, min_pallas_batch=1024):
        if key is None:
            key = jax.random.PRNGKey(0)
        k_w, k_b = jax.random.split(key)
        # Deterministic init mimicking nn.Linear default (uniform +-1/sqrt(E)).
        bound = 1.0 / jnp.sqrt(jnp.float32(embedding_size))
        # PyTorch convention: fc.weight is (C, E).
        self.fc_weight = jax.random.uniform(
            k_w, (num_classes, embedding_size), jnp.float32, -bound, bound
        )
        self.fc_bias = jax.random.uniform(
            k_b, (num_classes,), jnp.float32, -bound, bound
        )
        self.embedding_size = embedding_size
        self.num_classes = num_classes
        self.min_pallas_batch = min_pallas_batch

        # Hoisted one-time prep: transpose to (E, C), zero-pad C -> C_pad (128n),
        # cast weight to bf16.  No per-call transpose/cast work remains.
        c_pad = _round_up(num_classes, LANE)
        w_t = jnp.zeros((embedding_size, c_pad), jnp.float32)
        w_t = w_t.at[:, :num_classes].set(self.fc_weight.T)
        self.weight_t_pad = w_t.astype(jnp.bfloat16)
        b_p = jnp.zeros((1, c_pad), jnp.float32)
        self.bias_pad = b_p.at[:, :num_classes].set(self.fc_bias[None, :])

        self._fwd = jax.jit(
            functools.partial(
                linear_head_pallas, num_classes=num_classes, block_b=block_b
            )
        )
        # Tiny-batch fallback: a fused XLA dot avoids pallas_call launch overhead.
        self._fwd_xla = jax.jit(
            lambda x, w, b: x.astype(jnp.float32) @ w.T + b
        )

    def __call__(self, x_embed):
        # x_embed: (B, 1024) — output of the frozen DINOv2 backbone (see TODO).
        if x_embed.shape[0] < self.min_pallas_batch:
            return self._fwd_xla(x_embed, self.fc_weight, self.fc_bias)
        return self._fwd(x_embed, self.weight_t_pad, self.bias_pad)


if __name__ == "__main__":
    key = jax.random.PRNGKey(0)
    k_model, k_x = jax.random.split(key)

    num_classes = 10
    batch = 2
    embedding_size = 1024  # DINOv2 ViT-L/14 CLS embedding dim

    # min_pallas_batch=0 forces the Pallas path so the kernel is exercised even
    # at this toy batch (default 1024 would route B=2 to the XLA fallback).
    model = ClassifierPallas(num_classes, embedding_size, key=k_model,
                             min_pallas_batch=0)

    # Stand-in for backbone(x) output: (B, 1024) embeddings.
    x_embed = jax.random.normal(k_x, (batch, embedding_size), jnp.float32)

    logits = model(x_embed)
    jax.block_until_ready(logits)

    # Cross-check against plain f32 JAX reference of the linear head.
    # x/W are consumed as bf16 on the MXU and the output is written bf16, so
    # tolerance is loosened accordingly.
    ref = x_embed @ model.fc_weight.T + model.fc_bias
    assert logits.shape == (batch, num_classes)
    assert jnp.allclose(logits, ref, atol=5e-2, rtol=5e-2), (
        float(jnp.max(jnp.abs(logits - ref)))
    )

    print("KERNEL_OK")
</pallas_src>

<mosaic_0001>
module attributes {stable_mosaic.version = 11 : i64} {
  func.func @_linear_head_kernel(%arg0: i32, %arg1: memref<16x1024xf32, #tpu.memory_space<vmem>>, %arg2: memref<1024x128xbf16, #tpu.memory_space<vmem>>, %arg3: memref<1x128xf32, #tpu.memory_space<vmem>>, %arg4: memref<16x128xbf16, #tpu.memory_space<vmem>>) attributes {dimension_semantics = [#tpu.dimension_semantics<parallel>], iteration_bounds = array<i64: 1>, scalar_prefetch = 0 : i64, scratch_operands = 0 : i64, tpu.core_type = #tpu.core_type<tc>, window_params = [{transform_indices = @transform_0, window_bounds = array<i64: 16, 1024>}, {pipeline_mode = #tpu.pipeline_mode<synchronous>, transform_indices = @transform_1, window_bounds = array<i64: 1024, 128>}, {pipeline_mode = #tpu.pipeline_mode<synchronous>, transform_indices = @transform_2, window_bounds = array<i64: 1, 128>}, {transform_indices = @transform_3, window_bounds = array<i64: 16, 128>}]} {
    %c0 = arith.constant 0 : index
    %c0_0 = arith.constant 0 : index
    %0 = vector.load %arg1[%c0, %c0_0] : memref<16x1024xf32, #tpu.memory_space<vmem>>, vector<16x1024xf32>
    %1 = arith.truncf %0 : vector<16x1024xf32> to vector<16x1024xbf16>
    %c0_1 = arith.constant 0 : index
    %c0_2 = arith.constant 0 : index
    %2 = vector.load %arg2[%c0_1, %c0_2] : memref<1024x128xbf16, #tpu.memory_space<vmem>>, vector<1024x128xbf16>
    %cst = arith.constant dense<0.000000e+00> : vector<16x128xf32>
    %3 = tpu.matmul %1, %2, %cst {dimension_numbers = #tpu.dot_dimension_numbers<[1], [0], [0], [1], [0, 0, 1, 1], [], []>} : vector<16x1024xbf16>, vector<1024x128xbf16>, vector<16x128xf32> -> vector<16x128xf32>
    %c0_3 = arith.constant 0 : index
    %c0_4 = arith.constant 0 : index
    %4 = vector.load %arg3[%c0_3, %c0_4] : memref<1x128xf32, #tpu.memory_space<vmem>>, vector<1x128xf32>
    %5 = vector.broadcast %4 : vector<1x128xf32> to vector<16x128xf32>
    %6 = arith.addf %3, %5 : vector<16x128xf32>
    %7 = arith.truncf %6 : vector<16x128xf32> to vector<16x128xbf16>
    %c0_5 = arith.constant 0 : index
    %c0_6 = arith.constant 0 : index
    %8 = vector.load %arg4[%c0_5, %c0_6] : memref<16x128xbf16, #tpu.memory_space<vmem>>, vector<16x128xbf16>
    tpu.vector_store %arg4[%c0_5, %c0_6], %7 {strides = array<i32>} : memref<16x128xbf16, #tpu.memory_space<vmem>>, vector<16x128xbf16>,
    return
  }
  func.func @transform_0(%arg0: i32) -> (i32, i32) {
    %c0_i32 = arith.constant 0 : i32
    %c0_i32_0 = arith.constant 0 : i32
    return %arg0, %c0_i32 : i32, i32
  }
  func.func @transform_1(%arg0: i32) -> (i32, i32) {
    %c0_i32 = arith.constant 0 : i32
    %c0_i32_0 = arith.constant 0 : i32
    %c0_i32_1 = arith.constant 0 : i32
    return %c0_i32, %c0_i32_0 : i32, i32
  }
  func.func @transform_2(%arg0: i32) -> (i32, i32) {
    %c0_i32 = arith.constant 0 : i32
    %c0_i32_0 = arith.constant 0 : i32
    %c0_i32_1 = arith.constant 0 : i32
    return %c0_i32, %c0_i32_0 : i32, i32
  }
  func.func @transform_3(%arg0: i32) -> (i32, i32) {
    %c0_i32 = arith.constant 0 : i32
    %c0_i32_0 = arith.constant 0 : i32
    return %arg0, %c0_i32 : i32, i32
  }
}

</mosaic_0001>

<llo_original>
// kernel: linear_head_pallas.1
$region0: #{linear_head_pallas.1}
  #allocation0 [shape = 'u32[]', space=smem, size = 0x4, offset = 0x4, fixed_abs, tag = 'smem constant byte address 0x4 - core index']
  #allocation1 [shape = 'u32[144,128]{1,0:T(1,128)}', space=vmem, size = 0x12000, scoped, tag = 'internal scratch']
  %s0 = inlined_call_operand.hbm [shape: f32[2,1024], index: 0, kind: input, shape index: {}]
  %s1 = inlined_call_operand.hbm [shape: bf16[1024,128], index: 1, kind: input, shape index: {}]
  %s2 = inlined_call_operand.vmem [shape: f32[1,128], index: 2, kind: input, shape index: {}]
  %s3 = inlined_call_operand.vmem [shape: bf16[2,128], index: 3, kind: output, shape index: {}]
  %s4 = sld [smem:[#allocation0]]
  $region60: #{linear_head_pallas.1} parent=0
    _
  %s6 = ssub.s32 1, %s4
  %s7 = scalar_select 0, %s6, %s4
  $region1: #{linear_head_pallas.1} parent=0
    #allocation2 [shape = 'u8[65536]{0}', space=vmem, size = 0x10000, scoped, tag = 'input window, operand 0, single buffered']
    #allocation3 [shape = 's32[1]{0}', space=sflag, size = 0x4, scoped, tag = 'scoped memory for linear_head_pallas.1']
    #allocation4 [shape = 'u8[262144]{0}', space=vmem, size = 0x40000, scoped, tag = 'input window, operand 1, single buffered']
    #allocation5 [shape = 's32[1]{0}', space=sflag, size = 0x4, scoped, tag = 'scoped memory for linear_head_pallas.1']
    #allocation6 [shape = 'u8[4096]{0}', space=vmem, size = 0x1000, scoped, tag = 'output window, operand 0, single buffered']
    %8 = vsyncpa [#allocation3], 0
    %9 = vsyncpa [#allocation5], 0
    // Predicated region
    $region2: #{linear_head_pallas.1} parent=1 // pred_check
      _
    $region3: #{linear_head_pallas.1} parent=1 // pred_check_branch
      %11 = sbr.rel (0) target = $region5
    $region4: #{linear_head_pallas.1} parent=1 // pred_region
      %s13 = ssub.s32 2048, 256
      %14 = vsyncadd [#allocation3], %s13
      %s15 = sshll.u32 [#allocation2], 4
      %s16 = int_to_ptr.vmem [resolvable:$true] %s15
      %21 = dma.hbm_to_vmem [thread:$0]  %s0, 256, %s16, [#allocation3], 256, 256, 16
    $region5: #{linear_head_pallas.1} parent=1 // pred_fallthru
      _
    // Predicated region
    $region6: #{linear_head_pallas.1} parent=1 // pred_check
      _
    $region7: #{linear_head_pallas.1} parent=1 // pred_check_branch
      %23 = sbr.rel (0) target = $region9
    $region8: #{linear_head_pallas.1} parent=1 // pred_region
      %s25 = ssub.s32 8192, 8192
      %26 = vsyncadd [#allocation5], %s25
      %s27 = sshll.u32 [#allocation4], 4
      %s28 = int_to_ptr.vmem [resolvable:$true] %s27
      %33 = dma.hbm_to_vmem [thread:$0]  %s1, 8192, %s28, [#allocation5], 64, 64, 4
    $region9: #{linear_head_pallas.1} parent=1 // pred_fallthru
      _
    // Predicated region
    $region10: #{linear_head_pallas.1} parent=1 // pred_check
      _
    $region11: #{linear_head_pallas.1} parent=1 // pred_check_branch
      %35 = sbr.rel (0) target = $region13
    $region12: #{linear_head_pallas.1} parent=1 // pred_region
      _
    $region13: #{linear_head_pallas.1} parent=1 // pred_fallthru
      _
    // Predicated region
    $region14: #{linear_head_pallas.1} parent=1 // pred_check
      _
    $region15: #{linear_head_pallas.1} parent=1 // pred_check_branch
      %37 = sbr.rel (0) target = $region17
    $region16: #{linear_head_pallas.1} parent=1 // pred_region
      %38 = dma.done [#allocation3], 2048
    $region17: #{linear_head_pallas.1} parent=1 // pred_fallthru
      _
    // Predicated region
    $region18: #{linear_head_pallas.1} parent=1 // pred_check
      _
    $region19: #{linear_head_pallas.1} parent=1 // pred_check_branch
      %40 = sbr.rel (0) target = $region21
    $region20: #{linear_head_pallas.1} parent=1 // pred_region
      %41 = dma.done [#allocation5], 8192
    $region21: #{linear_head_pallas.1} parent=1 // pred_fallthru
      _
    %v43 = vld [vmem:[#allocation2] sm:$0xff]
    %v44 = vld [vmem:[#allocation2 + $0x8] sm:$0xff]
    %v45 = vld [vmem:[#allocation2 + $0x10] sm:$0xff]
    %v46 = vld [vmem:[#allocation2 + $0x18] sm:$0xff]
    %v47 = vld [vmem:[#allocation2 + $0x20] sm:$0xff]
    %v48 = vld [vmem:[#allocation2 + $0x28] sm:$0xff]
    %v49 = vld [vmem:[#allocation2 + $0x30] sm:$0xff]
    %v50 = vld [vmem:[#allocation2 + $0x38] sm:$0xff]
    %v51 = vld [vmem:[#allocation2 + $0x40] sm:$0xff]
    %v52 = vld [vmem:[#allocation2 + $0x48] sm:$0xff]
    %v53 = vld [vmem:[#allocation2 + $0x50] sm:$0xff]
    %v54 = vld [vmem:[#allocation2 + $0x58] sm:$0xff]
    %v55 = vld [vmem:[#allocation2 + $0x60] sm:$0xff]
    %v56 = vld [vmem:[#allocation2 + $0x68] sm:$0xff]
    %v57 = vld [vmem:[#allocation2 + $0x70] sm:$0xff]
    %v58 = vld [vmem:[#allocation2 + $0x78] sm:$0xff]
    %v75 = vcombine.low %v43, %v45
    %v76 = vcombine.high %v43, %v45
    %v77 = vcombine.low %v47, %v49
    %v78 = vcombine.high %v47, %v49
    %v80 = vunpack.c.l.s4 1983009808
    %v81 = vunpack.c.0.s8 %v80
    %v82 = vlaneseq
    %v83 = vshrl.u32 %v82, 7
    %v84 = vsub.s32 %v81, %v83
    %v85 = vrot.slane %v75, %v84
    %v87 = vunpack.c.l.s4 1983009808
    %v88 = vunpack.c.0.s8 %v87
    %v89 = vlaneseq
    %v90 = vshrl.u32 %v89, 7
    %v91 = vsub.s32 %v88, %v90
    %v92 = vrot.slane %v76, %v91
    %v94 = vunpack.c.l.s4 1983009808
    %v95 = vunpack.c.0.s8 %v94
    %v96 = vlaneseq
    %v97 = vshrl.u32 %v96, 7
    %v98 = vsub.s32 %v95, %v97
    %v99 = vrot.slane %v77, %v98
    %v101 = vunpack.c.l.s4 1983009808
    %v102 = vunpack.c.0.s8 %v101
    %v103 = vlaneseq
    %v104 = vshrl.u32 %v103, 7
    %v105 = vsub.s32 %v102, %v104
    %v106 = vrot.slane %v78, %v105
    %v107 = vcombine.low %v85, %v99
    %v108 = vcombine.high %v85, %v99
    %v109 = vcombine.low %v92, %v106
    %v110 = vcombine.high %v92, %v106
    %v111 = vcombine.low %v44, %v46
    %v112 = vcombine.high %v44, %v46
    %v113 = vcombine.low %v48, %v50
    %v114 = vcombine.high %v48, %v50
    %v116 = vunpack.c.l.s4 1983009808
    %v117 = vunpack.c.0.s8 %v116
    %v118 = vlaneseq
    %v119 = vshrl.u32 %v118, 7
    %v120 = vsub.s32 %v117, %v119
    %v121 = vrot.slane %v111, %v120
    %v123 = vunpack.c.l.s4 1983009808
    %v124 = vunpack.c.0.s8 %v123
    %v125 = vlaneseq
    %v126 = vshrl.u32 %v125, 7
    %v127 = vsub.s32 %v124, %v126
    %v128 = vrot.slane %v112, %v127
    %v130 = vunpack.c.l.s4 1983009808
    %v131 = vunpack.c.0.s8 %v130
    %v132 = vlaneseq
    %v133 = vshrl.u32 %v132, 7
    %v134 = vsub.s32 %v131, %v133
    %v135 = vrot.slane %v113, %v134
    %v137 = vunpack.c.l.s4 1983009808
    %v138 = vunpack.c.0.s8 %v137
    %v139 = vlaneseq
    %v140 = vshrl.u32 %v139, 7
    %v141 = vsub.s32 %v138, %v140
    %v142 = vrot.slane %v114, %v141
    %v143 = vcombine.low %v121, %v135
    %v144 = vcombine.high %v121, %v135
    %v145 = vcombine.low %v128, %v142
    %v146 = vcombine.high %v128, %v142
    %v147 = vcombine.low %v51, %v53
    %v148 = vcombine.high %v51, %v53
    %v149 = vcombine.low %v55, %v57
    %v150 = vcombine.high %v55, %v57
    %v152 = vunpack.c.l.s4 1983009808
    %v153 = vunpack.c.0.s8 %v152
    %v154 = vlaneseq
    %v155 = vshrl.u32 %v154, 7
    %v156 = vsub.s32 %v153, %v155
    %v157 = vrot.slane %v147, %v156
    %v159 = vunpack.c.l.s4 1983009808
    %v160 = vunpack.c.0.s8 %v159
    %v161 = vlaneseq
    %v162 = vshrl.u32 %v161, 7
    %v163 = vsub.s32 %v160, %v162
    %v164 = vrot.slane %v148, %v163
    %v166 = vunpack.c.l.s4 1983009808
    %v167 = vunpack.c.0.s8 %v166
    %v168 = vlaneseq
    %v169 = vshrl.u32 %v168, 7
    %v170 = vsub.s32 %v167, %v169
    %v171 = vrot.slane %v149, %v170
    %v173 = vunpack.c.l.s4 1983009808
    %v174 = vunpack.c.0.s8 %v173
    %v175 = vlaneseq
    %v176 = vshrl.u32 %v175, 7
    %v177 = vsub.s32 %v174, %v176
    %v178 = vrot.slane %v150, %v177
    %v179 = vcombine.low %v157, %v171
    %v180 = vcombine.high %v157, %v171
    %v181 = vcombine.low %v164, %v178
    %v182 = vcombine.high %v164, %v178
    %v183 = vcombine.low %v52, %v54
    %v184 = vcombine.high %v52, %v54
    %v185 = vcombine.low %v56, %v58
    %v186 = vcombine.high %v56, %v58
    %v188 = vunpack.c.l.s4 1983009808
    %v189 = vunpack.c.0.s8 %v188
    %v190 = vlaneseq
    %v191 = vshrl.u32 %v190, 7
    %v192 = vsub.s32 %v189, %v191
    %v193 = vrot.slane %v183, %v192
    %v195 = vunpack.c.l.s4 1983009808
    %v196 = vunpack.c.0.s8 %v195
    %v197 = vlaneseq
    %v198 = vshrl.u32 %v197, 7
    %v199 = vsub.s32 %v196, %v198
    %v200 = vrot.slane %v184, %v199
    %v202 = vunpack.c.l.s4 1983009808
    %v203 = vunpack.c.0.s8 %v202
    %v204 = vlaneseq
    %v205 = vshrl.u32 %v204, 7
    %v206 = vsub.s32 %v203, %v205
    %v207 = vrot.slane %v185, %v206
    %v209 = vunpack.c.l.s4 1983009808
    %v210 = vunpack.c.0.s8 %v209
    %v211 = vlaneseq
    %v212 = vshrl.u32 %v211, 7
    %v213 = vsub.s32 %v210, %v212
    %v214 = vrot.slane %v186, %v213
    %v215 = vcombine.low %v193, %v207
    %v216 = vcombine.high %v193, %v207
    %v217 = vcombine.low %v200, %v214
    %v218 = vcombine.high %v200, %v214
    %v235 = vpack.c.bf16 %v179, %v107
    %v236 = vpack.c.bf16 %v180, %v108
    %v237 = vpack.c.bf16 %v181, %v109
    %v238 = vpack.c.bf16 %v182, %v110
    %v239 = vpack.c.bf16 %v215, %v143
    %v240 = vpack.c.bf16 %v216, %v144
    %v241 = vpack.c.bf16 %v217, %v145
    %v242 = vpack.c.bf16 %v218, %v146
    %v243 = vld [vmem:[#allocation4] sm:$0xf]
    %v244 = vld [vmem:[#allocation4 + $0x4] sm:$0xf]
    %v245 = vld [vmem:[#allocation4 + $0x8] sm:$0xf]
    %v246 = vld [vmem:[#allocation4 + $0xc] sm:$0xf]
    %v247 = vld [vmem:[#allocation4 + $0x10] sm:$0xf]
    %v248 = vld [vmem:[#allocation4 + $0x14] sm:$0xf]
    %v249 = vld [vmem:[#allocation4 + $0x18] sm:$0xf]
    %v250 = vld [vmem:[#allocation4 + $0x1c] sm:$0xf]
    %v251 = vld [vmem:[#allocation4 + $0x20] sm:$0xf]
    %v252 = vld [vmem:[#allocation4 + $0x24] sm:$0xf]
    %v253 = vld [vmem:[#allocation4 + $0x28] sm:$0xf]
    %v254 = vld [vmem:[#allocation4 + $0x2c] sm:$0xf]
    %v255 = vld [vmem:[#allocation4 + $0x30] sm:$0xf]
    %v256 = vld [vmem:[#allocation4 + $0x34] sm:$0xf]
    %v257 = vld [vmem:[#allocation4 + $0x38] sm:$0xf]
    %v258 = vld [vmem:[#allocation4 + $0x3c] sm:$0xf]
    %v259 = vld [vmem:[#allocation4 + $0x40] sm:$0xf]
    %v260 = vld [vmem:[#allocation4 + $0x44] sm:$0xf]
    %v261 = vld [vmem:[#allocation4 + $0x48] sm:$0xf]
    %v262 = vld [vmem:[#allocation4 + $0x4c] sm:$0xf]
    %v263 = vld [vmem:[#allocation4 + $0x50] sm:$0xf]
    %v264 = vld [vmem:[#allocation4 + $0x54] sm:$0xf]
    %v265 = vld [vmem:[#allocation4 + $0x58] sm:$0xf]
    %v266 = vld [vmem:[#allocation4 + $0x5c] sm:$0xf]
    %v267 = vld [vmem:[#allocation4 + $0x60] sm:$0xf]
    %v268 = vld [vmem:[#allocation4 + $0x64] sm:$0xf]
    %v269 = vld [vmem:[#allocation4 + $0x68] sm:$0xf]
    %v270 = vld [vmem:[#allocation4 + $0x6c] sm:$0xf]
    %v271 = vld [vmem:[#allocation4 + $0x70] sm:$0xf]
    %v272 = vld [vmem:[#allocation4 + $0x74] sm:$0xf]
    %v273 = vld [vmem:[#allocation4 + $0x78] sm:$0xf]
    %v274 = vld [vmem:[#allocation4 + $0x7c] sm:$0xf]
    %v275 = vld [vmem:[#allocation4 + $0x80] sm:$0xf]
    %v276 = vld [vmem:[#allocation4 + $0x84] sm:$0xf]
    %v277 = vld [vmem:[#allocation4 + $0x88] sm:$0xf]
    %v278 = vld [vmem:[#allocation4 + $0x8c] sm:$0xf]
    %v279 = vld [vmem:[#allocation4 + $0x90] sm:$0xf]
    %v280 = vld [vmem:[#allocation4 + $0x94] sm:$0xf]
    %v281 = vld [vmem:[#allocation4 + $0x98] sm:$0xf]
    %v282 = vld [vmem:[#allocation4 + $0x9c] sm:$0xf]
    %v283 = vld [vmem:[#allocation4 + $0xa0] sm:$0xf]
    %v284 = vld [vmem:[#allocation4 + $0xa4] sm:$0xf]
    %v285 = vld [vmem:[#allocation4 + $0xa8] sm:$0xf]
    %v286 = vld [vmem:[#allocation4 + $0xac] sm:$0xf]
    %v287 = vld [vmem:[#allocation4 + $0xb0] sm:$0xf]
    %v288 = vld [vmem:[#allocation4 + $0xb4] sm:$0xf]
    %v289 = vld [vmem:[#allocation4 + $0xb8] sm:$0xf]
    %v290 = vld [vmem:[#allocation4 + $0xbc] sm:$0xf]
    %v291 = vld [vmem:[#allocation4 + $0xc0] sm:$0xf]
    %v292 = vld [vmem:[#allocation4 + $0xc4] sm:$0xf]
    %v293 = vld [vmem:[#allocation4 + $0xc8] sm:$0xf]
    %v294 = vld [vmem:[#allocation4 + $0xcc] sm:$0xf]
    %v295 = vld [vmem:[#allocation4 + $0xd0] sm:$0xf]
    %v296 = vld [vmem:[#allocation4 + $0xd4] sm:$0xf]
    %v297 = vld [vmem:[#allocation4 + $0xd8] sm:$0xf]
    %v298 = vld [vmem:[#allocation4 + $0xdc] sm:$0xf]
    %v299 = vld [vmem:[#allocation4 + $0xe0] sm:$0xf]
    %v300 = vld [vmem:[#allocation4 + $0xe4] sm:$0xf]
    %v301 = vld [vmem:[#allocation4 + $0xe8] sm:$0xf]
    %v302 = vld [vmem:[#allocation4 + $0xec] sm:$0xf]
    %v303 = vld [vmem:[#allocation4 + $0xf0] sm:$0xf]
    %v304 = vld [vmem:[#allocation4 + $0xf4] sm:$0xf]
    %v305 = vld [vmem:[#allocation4 + $0xf8] sm:$0xf]
    %v306 = vld [vmem:[#allocation4 + $0xfc] sm:$0xf]
    %v307 = vld [vmem:[#allocation4 + $0x100] sm:$0xf]
    %v308 = vld [vmem:[#allocation4 + $0x104] sm:$0xf]
    %v309 = vld [vmem:[#allocation4 + $0x108] sm:$0xf]
    %v310 = vld [vmem:[#allocation4 + $0x10c] sm:$0xf]
    %v311 = vld [vmem:[#allocation4 + $0x110] sm:$0xf]
    %v312 = vld [vmem:[#allocation4 + $0x114] sm:$0xf]
    %v313 = vld [vmem:[#allocation4 + $0x118] sm:$0xf]
    %v314 = vld [vmem:[#allocation4 + $0x11c] sm:$0xf]
    %v315 = vld [vmem:[#allocation4 + $0x120] sm:$0xf]
    %v316 = vld [vmem:[#allocation4 + $0x124] sm:$0xf]
    %v317 = vld [vmem:[#allocation4 + $0x128] sm:$0xf]
    %v318 = vld [vmem:[#allocation4 + $0x12c] sm:$0xf]
    %v319 = vld [vmem:[#allocation4 + $0x130] sm:$0xf]
    %v320 = vld [vmem:[#allocation4 + $0x134] sm:$0xf]
    %v321 = vld [vmem:[#allocation4 + $0x138] sm:$0xf]
    %v322 = vld [vmem:[#allocation4 + $0x13c] sm:$0xf]
    %v323 = vld [vmem:[#allocation4 + $0x140] sm:$0xf]
    %v324 = vld [vmem:[#allocation4 + $0x144] sm:$0xf]
    %v325 = vld [vmem:[#allocation4 + $0x148] sm:$0xf]
    %v326 = vld [vmem:[#allocation4 + $0x14c] sm:$0xf]
    %v327 = vld [vmem:[#allocation4 + $0x150] sm:$0xf]
    %v328 = vld [vmem:[#allocation4 + $0x154] sm:$0xf]
    %v329 = vld [vmem:[#allocation4 + $0x158] sm:$0xf]
    %v330 = vld [vmem:[#allocation4 + $0x15c] sm:$0xf]
    %v331 = vld [vmem:[#allocation4 + $0x160] sm:$0xf]
    %v332 = vld [vmem:[#allocation4 + $0x164] sm:$0xf]
    %v333 = vld [vmem:[#allocation4 + $0x168] sm:$0xf]
    %v334 = vld [vmem:[#allocation4 + $0x16c] sm:$0xf]
    %v335 = vld [vmem:[#allocation4 + $0x170] sm:$0xf]
    %v336 = vld [vmem:[#allocation4 + $0x174] sm:$0xf]
    %v337 = vld [vmem:[#allocation4 + $0x178] sm:$0xf]
    %v338 = vld [vmem:[#allocation4 + $0x17c] sm:$0xf]
    %v339 = vld [vmem:[#allocation4 + $0x180] sm:$0xf]
    %v340 = vld [vmem:[#allocation4 + $0x184] sm:$0xf]
    %v341 = vld [vmem:[#allocation4 + $0x188] sm:$0xf]
    %v342 = vld [vmem:[#allocation4 + $0x18c] sm:$0xf]
    %v343 = vld [vmem:[#allocation4 + $0x190] sm:$0xf]
    %v344 = vld [vmem:[#allocation4 + $0x194] sm:$0xf]
    %v345 = vld [vmem:[#allocation4 + $0x198] sm:$0xf]
    %v346 = vld [vmem:[#allocation4 + $0x19c] sm:$0xf]
    %v347 = vld [vmem:[#allocation4 + $0x1a0] sm:$0xf]
    %v348 = vld [vmem:[#allocation4 + $0x1a4] sm:$0xf]
    %v349 = vld [vmem:[#allocation4 + $0x1a8] sm:$0xf]
    %v350 = vld [vmem:[#allocation4 + $0x1ac] sm:$0xf]
    %v351 = vld [vmem:[#allocation4 + $0x1b0] sm:$0xf]
    %v352 = vld [vmem:[#allocation4 + $0x1b4] sm:$0xf]
    %v353 = vld [vmem:[#allocation4 + $0x1b8] sm:$0xf]
    %v354 = vld [vmem:[#allocation4 + $0x1bc] sm:$0xf]
    %v355 = vld [vmem:[#allocation4 + $0x1c0] sm:$0xf]
    %v356 = vld [vmem:[#allocation4 + $0x1c4] sm:$0xf]
    %v357 = vld [vmem:[#allocation4 + $0x1c8] sm:$0xf]
    %v358 = vld [vmem:[#allocation4 + $0x1cc] sm:$0xf]
    %v359 = vld [vmem:[#allocation4 + $0x1d0] sm:$0xf]
    %v360 = vld [vmem:[#allocation4 + $0x1d4] sm:$0xf]
    %v361 = vld [vmem:[#allocation4 + $0x1d8] sm:$0xf]
    %v362 = vld [vmem:[#allocation4 + $0x1dc] sm:$0xf]
    %v363 = vld [vmem:[#allocation4 + $0x1e0] sm:$0xf]
    %v364 = vld [vmem:[#allocation4 + $0x1e4] sm:$0xf]
    %v365 = vld [vmem:[#allocation4 + $0x1e8] sm:$0xf]
    %v366 = vld [vmem:[#allocation4 + $0x1ec] sm:$0xf]
    %v367 = vld [vmem:[#allocation4 + $0x1f0] sm:$0xf]
    %v368 = vld [vmem:[#allocation4 + $0x1f4] sm:$0xf]
    %v369 = vld [vmem:[#allocation4 + $0x1f8] sm:$0xf]
    %v370 = vld [vmem:[#allocation4 + $0x1fc] sm:$0xf]
    %v371 = vld [vmem:[%s2] sm:$0x1]
    %v373 = vlaneseq
    %v374 = vshrl.u32 %v373, 7
    %v375 = vsub.s32 0, %v374
    %v376 = vrot.slane %v371, %v375
    %v506 = vunpack.c.l.b16 %v243
    %v507 = vunpack.c.l.b16 %v244
    %v508 = vunpack.c.l.b16 %v245
    %v509 = vunpack.c.l.b16 %v246
    %v510 = vunpack.c.l.b16 %v247
    %v511 = vunpack.c.l.b16 %v248
    %v512 = vunpack.c.l.b16 %v249
    %v513 = vunpack.c.l.b16 %v250
    %v514 = vunpack.c.l.b16 %v251
    %v515 = vunpack.c.l.b16 %v252
    %v516 = vunpack.c.l.b16 %v253
    %v517 = vunpack.c.l.b16 %v254
    %v518 = vunpack.c.l.b16 %v255
    %v519 = vunpack.c.l.b16 %v256
    %v520 = vunpack.c.l.b16 %v257
    %v521 = vunpack.c.l.b16 %v258
    %v522 = vunpack.c.l.b16 %v259
    %v523 = vunpack.c.l.b16 %v260
    %v524 = vunpack.c.l.b16 %v261
    %v525 = vunpack.c.l.b16 %v262
    %v526 = vunpack.c.l.b16 %v263
    %v527 = vunpack.c.l.b16 %v264
    %v528 = vunpack.c.l.b16 %v265
    %v529 = vunpack.c.l.b16 %v266
    %v530 = vunpack.c.l.b16 %v267
    %v531 = vunpack.c.l.b16 %v268
    %v532 = vunpack.c.l.b16 %v269
    %v533 = vunpack.c.l.b16 %v270
    %v534 = vunpack.c.l.b16 %v271
    %v535 = vunpack.c.l.b16 %v272
    %v536 = vunpack.c.l.b16 %v273
    %v537 = vunpack.c.l.b16 %v274
    %v538 = vunpack.c.l.b16 %v275
    %v539 = vunpack.c.l.b16 %v276
    %v540 = vunpack.c.l.b16 %v277
    %v541 = vunpack.c.l.b16 %v278
    %v542 = vunpack.c.l.b16 %v279
    %v543 = vunpack.c.l.b16 %v280
    %v544 = vunpack.c.l.b16 %v281
    %v545 = vunpack.c.l.b16 %v282
    %v546 = vunpack.c.l.b16 %v283
    %v547 = vunpack.c.l.b16 %v284
    %v548 = vunpack.c.l.b16 %v285
    %v549 = vunpack.c.l.b16 %v286
    %v550 = vunpack.c.l.b16 %v287
    %v551 = vunpack.c.l.b16 %v288
    %v552 = vunpack.c.l.b16 %v289
    %v553 = vunpack.c.l.b16 %v290
    %v554 = vunpack.c.l.b16 %v291
    %v555 = vunpack.c.l.b16 %v292
    %v556 = vunpack.c.l.b16 %v293
    %v557 = vunpack.c.l.b16 %v294
    %v558 = vunpack.c.l.b16 %v295
    %v559 = vunpack.c.l.b16 %v296
    %v560 = vunpack.c.l.b16 %v297
    %v561 = vunpack.c.l.b16 %v298
    %v562 = vunpack.c.l.b16 %v299
    %v563 = vunpack.c.l.b16 %v300
    %v564 = vunpack.c.l.b16 %v301
    %v565 = vunpack.c.l.b16 %v302
    %v566 = vunpack.c.l.b16 %v303
    %v567 = vunpack.c.l.b16 %v304
    %v568 = vunpack.c.l.b16 %v305
    %v569 = vunpack.c.l.b16 %v306
    %v570 = vunpack.c.l.b16 %v307
    %v571 = vunpack.c.l.b16 %v308
    %v572 = vunpack.c.l.b16 %v309
    %v573 = vunpack.c.l.b16 %v310
    %v574 = vunpack.c.l.b16 %v311
    %v575 = vunpack.c.l.b16 %v312
    %v576 = vunpack.c.l.b16 %v313
    %v577 = vunpack.c.l.b16 %v314
    %v578 = vunpack.c.l.b16 %v315
    %v579 = vunpack.c.l.b16 %v316
    %v580 = vunpack.c.l.b16 %v317
    %v581 = vunpack.c.l.b16 %v318
    %v582 = vunpack.c.l.b16 %v319
    %v583 = vunpack.c.l.b16 %v320
    %v584 = vunpack.c.l.b16 %v321
    %v585 = vunpack.c.l.b16 %v322
    %v586 = vunpack.c.l.b16 %v323
    %v587 = vunpack.c.l.b16 %v324
    %v588 = vunpack.c.l.b16 %v325
    %v589 = vunpack.c.l.b16 %v326
    %v590 = vunpack.c.l.b16 %v327
    %v591 = vunpack.c.l.b16 %v328
    %v592 = vunpack.c.l.b16 %v329
    %v593 = vunpack.c.l.b16 %v330
    %v594 = vunpack.c.l.b16 %v331
    %v595 = vunpack.c.l.b16 %v332
    %v596 = vunpack.c.l.b16 %v333
    %v597 = vunpack.c.l.b16 %v334
    %v598 = vunpack.c.l.b16 %v335
    %v599 = vunpack.c.l.b16 %v336
    %v600 = vunpack.c.l.b16 %v337
    %v601 = vunpack.c.l.b16 %v338
    %v602 = vunpack.c.l.b16 %v339
    %v603 = vunpack.c.l.b16 %v340
    %v604 = vunpack.c.l.b16 %v341
    %v605 = vunpack.c.l.b16 %v342
    %v606 = vunpack.c.l.b16 %v343
    %v607 = vunpack.c.l.b16 %v344
    %v608 = vunpack.c.l.b16 %v345
    %v609 = vunpack.c.l.b16 %v346
    %v610 = vunpack.c.l.b16 %v347
    %v611 = vunpack.c.l.b16 %v348
    %v612 = vunpack.c.l.b16 %v349
    %v613 = vunpack.c.l.b16 %v350
    %v614 = vunpack.c.l.b16 %v351
    %v615 = vunpack.c.l.b16 %v352
    %v616 = vunpack.c.l.b16 %v353
    %v617 = vunpack.c.l.b16 %v354
    %v618 = vunpack.c.l.b16 %v355
    %v619 = vunpack.c.l.b16 %v356
    %v620 = vunpack.c.l.b16 %v357
    %v621 = vunpack.c.l.b16 %v358
    %v622 = vunpack.c.l.b16 %v359
    %v623 = vunpack.c.l.b16 %v360
    %v624 = vunpack.c.l.b16 %v361
    %v625 = vunpack.c.l.b16 %v362
    %v626 = vunpack.c.l.b16 %v363
    %v627 = vunpack.c.l.b16 %v364
    %v628 = vunpack.c.l.b16 %v365
    %v629 = vunpack.c.l.b16 %v366
    %v630 = vunpack.c.l.b16 %v367
    %v631 = vunpack.c.l.b16 %v368
    %v632 = vunpack.c.l.b16 %v369
    %v633 = vunpack.c.l.b16 %v370
    %v634 = vpack.c.b16 %v507, %v506
    %v635 = vpack.c.b16 %v509, %v508
    %v636 = vpack.c.b16 %v511, %v510
    %v637 = vpack.c.b16 %v513, %v512
    %v638 = vpack.c.b16 %v515, %v514
    %v639 = vpack.c.b16 %v517, %v516
    %v640 = vpack.c.b16 %v519, %v518
    %v641 = vpack.c.b16 %v521, %v520
    %v642 = vpack.c.b16 %v523, %v522
    %v643 = vpack.c.b16 %v525, %v524
    %v644 = vpack.c.b16 %v527, %v526
    %v645 = vpack.c.b16 %v529, %v528
    %v646 = vpack.c.b16 %v531, %v530
    %v647 = vpack.c.b16 %v533, %v532
    %v648 = vpack.c.b16 %v535, %v534
    %v649 = vpack.c.b16 %v537, %v536
    %v650 = vpack.c.b16 %v539, %v538
    %v651 = vpack.c.b16 %v541, %v540
    %v652 = vpack.c.b16 %v543, %v542
    %v653 = vpack.c.b16 %v545, %v544
    %v654 = vpack.c.b16 %v547, %v546
    %v655 = vpack.c.b16 %v549, %v548
    %v656 = vpack.c.b16 %v551, %v550
    %v657 = vpack.c.b16 %v553, %v552
    %v658 = vpack.c.b16 %v555, %v554
    %v659 = vpack.c.b16 %v557, %v556
    %v660 = vpack.c.b16 %v559, %v558
    %v661 = vpack.c.b16 %v561, %v560
    %v662 = vpack.c.b16 %v563, %v562
    %v663 = vpack.c.b16 %v565, %v564
    %v664 = vpack.c.b16 %v567, %v566
    %v665 = vpack.c.b16 %v569, %v568
    %v666 = vpack.c.b16 %v571, %v570
    %v667 = vpack.c.b16 %v573, %v572
    %v668 = vpack.c.b16 %v575, %v574
    %v669 = vpack.c.b16 %v577, %v576
    %v670 = vpack.c.b16 %v579, %v578
    %v671 = vpack.c.b16 %v581, %v580
    %v672 = vpack.c.b16 %v583, %v582
    %v673 = vpack.c.b16 %v585, %v584
    %v674 = vpack.c.b16 %v587, %v586
    %v675 = vpack.c.b16 %v589, %v588
    %v676 = vpack.c.b16 %v591, %v590
    %v677 = vpack.c.b16 %v593, %v592
    %v678 = vpack.c.b16 %v595, %v594
    %v679 = vpack.c.b16 %v597, %v596
    %v680 = vpack.c.b16 %v599, %v598
    %v681 = vpack.c.b16 %v601, %v600
    %v682 = vpack.c.b16 %v603, %v602
    %v683 = vpack.c.b16 %v605, %v604
    %v684 = vpack.c.b16 %v607, %v606
    %v685 = vpack.c.b16 %v609, %v608
    %v686 = vpack.c.b16 %v611, %v610
    %v687 = vpack.c.b16 %v613, %v612
    %v688 = vpack.c.b16 %v615, %v614
    %v689 = vpack.c.b16 %v617, %v616
    %v690 = vpack.c.b16 %v619, %v618
    %v691 = vpack.c.b16 %v621, %v620
    %v692 = vpack.c.b16 %v623, %v622
    %v693 = vpack.c.b16 %v625, %v624
    %v694 = vpack.c.b16 %v627, %v626
    %v695 = vpack.c.b16 %v629, %v628
    %v696 = vpack.c.b16 %v631, %v630
    %v697 = vpack.c.b16 %v633, %v632
    %762 = vmatprep.subr.bf16.mxu0 0
    %763 = vmatpush1.bf16.msra.mxu0 %v641
    %764 = vmatprep.subr.bf16.mxu0 0
    %765 = vmatpush1.bf16.msra.mxu0 %v640
    %766 = vmatprep.subr.bf16.mxu0 0
    %767 = vmatpush1.bf16.msra.mxu0 %v639
    %768 = vmatprep.subr.bf16.mxu0 0
    %769 = vmatpush1.bf16.msra.mxu0 %v638
    %770 = vmatprep.subr.bf16.mxu0 0
    %771 = vmatpush1.bf16.msra.mxu0 %v637
    %772 = vmatprep.subr.bf16.mxu0 0
    %773 = vmatpush1.bf16.msra.mxu0 %v636
    %774 = vmatprep.subr.bf16.mxu0 0
    %775 = vmatpush1.bf16.msra.mxu0 %v635
    %776 = vmatprep.subr.bf16.mxu0 0
    %777 = vmatpush1.bf16.msra.mxu0 %v634
    %778 = vmatprep.subr.bf16.mxu0 0
    %779 = vmatpush2.bf16.msra.mxu0 %v649
    %780 = vmatprep.subr.bf16.mxu0 0
    %781 = vmatpush2.bf16.msra.mxu0 %v648
    %782 = vmatprep.subr.bf16.mxu0 0
    %783 = vmatpush2.bf16.msra.mxu0 %v647
    %784 = vmatprep.subr.bf16.mxu0 0
    %785 = vmatpush2.bf16.msra.mxu0 %v646
    %786 = vmatprep.subr.bf16.mxu0 0
    %787 = vmatpush2.bf16.msra.mxu0 %v645
    %788 = vmatprep.subr.bf16.mxu0 0
    %789 = vmatpush2.bf16.msra.mxu0 %v644
    %790 = vmatprep.subr.bf16.mxu0 0
    %791 = vmatpush2.bf16.msra.mxu0 %v643
    %792 = vmatprep.subr.bf16.mxu0 0
    %793 = vmatpush2.bf16.msra.mxu0 %v642
    %794 = vmatprep.mubr.bf16.mxu0 %v236
    %795 = vmatmul.mubr.bf16.gmra.mxu0 %v235
    %v796 = vpop.f32.mrf.mxu0
    %v797 = vadd.f32 %v376, %v796
    %v798 = vpop.f32.mrf.mxu0
    %v799 = vpop.f32.mrf.mxu0
    %v800 = vadd.f32 %v376, %v799
    %v801 = vpop.f32.mrf.mxu0
    %802 = vdwg.mxu0
    %803 = vmatprep.subr.bf16.mxu0 0
    %804 = vmatpush1.bf16.msra.mxu0 %v657
    %805 = vmatprep.subr.bf16.mxu0 0
    %806 = vmatpush1.bf16.msra.mxu0 %v656
    %807 = vmatprep.subr.bf16.mxu0 0
    %808 = vmatpush1.bf16.msra.mxu0 %v655
    %809 = vmatprep.subr.bf16.mxu0 0
    %810 = vmatpush1.bf16.msra.mxu0 %v654
    %811 = vmatprep.subr.bf16.mxu0 0
    %812 = vmatpush1.bf16.msra.mxu0 %v653
    %813 = vmatprep.subr.bf16.mxu0 0
    %814 = vmatpush1.bf16.msra.mxu0 %v652
    %815 = vmatprep.subr.bf16.mxu0 0
    %816 = vmatpush1.bf16.msra.mxu0 %v651
    %817 = vmatprep.subr.bf16.mxu0 0
    %818 = vmatpush1.bf16.msra.mxu0 %v650
    %819 = vmatprep.subr.bf16.mxu0 0
    %820 = vmatpush2.bf16.msra.mxu0 %v665
    %821 = vmatprep.subr.bf16.mxu0 0
    %822 = vmatpush2.bf16.msra.mxu0 %v664
    %823 = vmatprep.subr.bf16.mxu0 0
    %824 = vmatpush2.bf16.msra.mxu0 %v663
    %825 = vmatprep.subr.bf16.mxu0 0
    %826 = vmatpush2.bf16.msra.mxu0 %v662
    %827 = vmatprep.subr.bf16.mxu0 0
    %828 = vmatpush2.bf16.msra.mxu0 %v661
    %829 = vmatprep.subr.bf16.mxu0 0
    %830 = vmatpush2.bf16.msra.mxu0 %v660
    %831 = vmatprep.subr.bf16.mxu0 0
    %832 = vmatpush2.bf16.msra.mxu0 %v659
    %833 = vmatprep.subr.bf16.mxu0 0
    %834 = vmatpush2.bf16.msra.mxu0 %v658
    %835 = vmatprep.mubr.bf16.mxu0 %v238
    %836 = vmatmul.mubr.bf16.gmra.mxu0 %v237
    %v837 = vpop.f32.mrf.mxu0
    %v838 = vadd.f32 %v797, %v837
    %v839 = vpop.f32.mrf.mxu0
    %v840 = vpop.f32.mrf.mxu0
    %v841 = vadd.f32 %v800, %v840
    %v842 = vpop.f32.mrf.mxu0
    %843 = vdwg.mxu0
    %844 = vmatprep.subr.bf16.mxu0 0
    %845 = vmatpush1.bf16.msra.mxu0 %v673
    %846 = vmatprep.subr.bf16.mxu0 0
    %847 = vmatpush1.bf16.msra.mxu0 %v672
    %848 = vmatprep.subr.bf16.mxu0 0
    %849 = vmatpush1.bf16.msra.mxu0 %v671
    %850 = vmatprep.subr.bf16.mxu0 0
    %851 = vmatpush1.bf16.msra.mxu0 %v670
    %852 = vmatprep.subr.bf16.mxu0 0
    %853 = vmatpush1.bf16.msra.mxu0 %v669
    %854 = vmatprep.subr.bf16.mxu0 0
    %855 = vmatpush1.bf16.msra.mxu0 %v668
    %856 = vmatprep.subr.bf16.mxu0 0
    %857 = vmatpush1.bf16.msra.mxu0 %v667
    %858 = vmatprep.subr.bf16.mxu0 0
    %859 = vmatpush1.bf16.msra.mxu0 %v666
    %860 = vmatprep.subr.bf16.mxu0 0
    %861 = vmatpush2.bf16.msra.mxu0 %v681
    %862 = vmatprep.subr.bf16.mxu0 0
    %863 = vmatpush2.bf16.msra.mxu0 %v680
    %864 = vmatprep.subr.bf16.mxu0 0
    %865 = vmatpush2.bf16.msra.mxu0 %v679
    %866 = vmatprep.subr.bf16.mxu0 0
    %867 = vmatpush2.bf16.msra.mxu0 %v678
    %868 = vmatprep.subr.bf16.mxu0 0
    %869 = vmatpush2.bf16.msra.mxu0 %v677
    %870 = vmatprep.subr.bf16.mxu0 0
    %871 = vmatpush2.bf16.msra.mxu0 %v676
    %872 = vmatprep.subr.bf16.mxu0 0
    %873 = vmatpush2.bf16.msra.mxu0 %v675
    %874 = vmatprep.subr.bf16.mxu0 0
    %875 = vmatpush2.bf16.msra.mxu0 %v674
    %876 = vmatprep.mubr.bf16.mxu0 %v240
    %877 = vmatmul.mubr.bf16.gmra.mxu0 %v239
    %v878 = vpop.f32.mrf.mxu0
    %v879 = vadd.f32 %v838, %v878
    %v880 = vpop.f32.mrf.mxu0
    %v881 = vpop.f32.mrf.mxu0
    %v882 = vadd.f32 %v841, %v881
    %v883 = vpop.f32.mrf.mxu0
    %884 = vdwg.mxu0
    %885 = vmatprep.subr.bf16.mxu0 0
    %886 = vmatpush1.bf16.msra.mxu0 %v689
    %887 = vmatprep.subr.bf16.mxu0 0
    %888 = vmatpush1.bf16.msra.mxu0 %v688
    %889 = vmatprep.subr.bf16.mxu0 0
    %890 = vmatpush1.bf16.msra.mxu0 %v687
    %891 = vmatprep.subr.bf16.mxu0 0
    %892 = vmatpush1.bf16.msra.mxu0 %v686
    %893 = vmatprep.subr.bf16.mxu0 0
    %894 = vmatpush1.bf16.msra.mxu0 %v685
    %895 = vmatprep.subr.bf16.mxu0 0
    %896 = vmatpush1.bf16.msra.mxu0 %v684
    %897 = vmatprep.subr.bf16.mxu0 0
    %898 = vmatpush1.bf16.msra.mxu0 %v683
    %899 = vmatprep.subr.bf16.mxu0 0
    %900 = vmatpush1.bf16.msra.mxu0 %v682
    %901 = vmatprep.subr.bf16.mxu0 0
    %902 = vmatpush2.bf16.msra.mxu0 %v697
    %903 = vmatprep.subr.bf16.mxu0 0
    %904 = vmatpush2.bf16.msra.mxu0 %v696
    %905 = vmatprep.subr.bf16.mxu0 0
    %906 = vmatpush2.bf16.msra.mxu0 %v695
    %907 = vmatprep.subr.bf16.mxu0 0
    %908 = vmatpush2.bf16.msra.mxu0 %v694
    %909 = vmatprep.subr.bf16.mxu0 0
    %910 = vmatpush2.bf16.msra.mxu0 %v693
    %911 = vmatprep.subr.bf16.mxu0 0
    %912 = vmatpush2.bf16.msra.mxu0 %v692
    %913 = vmatprep.subr.bf16.mxu0 0
    %914 = vmatpush2.bf16.msra.mxu0 %v691
    %915 = vmatprep.subr.bf16.mxu0 0
    %916 = vmatpush2.bf16.msra.mxu0 %v690
    %917 = vmatprep.mubr.bf16.mxu0 %v242
    %918 = vmatmul.mubr.bf16.gmra.mxu0 %v241
    %v919 = vpop.f32.mrf.mxu0
    %v920 = vadd.f32 %v879, %v919
    %v921 = vpop.f32.mrf.mxu0
    %v922 = vpop.f32.mrf.mxu0
    %v923 = vadd.f32 %v882, %v922
    %v924 = vpop.f32.mrf.mxu0
    %925 = vdwg.mxu0
    %v926 = vpack.c.bf16 %v923, %v920
    %v928 = vcombine.high %v926, %v926
    %v930 = vunpack.c.l.s4 1966171168
    %v931 = vunpack.c.0.s8 %v930
    %v932 = vlaneseq
    %v933 = vshrl.u32 %v932, 7
    %v934 = vsub.s32 %v931, %v933
    %v935 = vrot.slane %v926, %v934
    %v937 = vunpack.c.l.s4 1966171168
    %v938 = vunpack.c.0.s8 %v937
    %v939 = vlaneseq
    %v940 = vshrl.u32 %v939, 7
    %v941 = vsub.s32 %v938, %v940
    %v942 = vrot.slane %v928, %v941
    %v943 = vcombine.high %v935, %v935
    %v944 = vcombine.high %v942, %v942
    %v946 = vunpack.c.l.s4 1966171168
    %v947 = vunpack.c.0.s8 %v946
    %v948 = vlaneseq
    %v949 = vshrl.u32 %v948, 7
    %v950 = vsub.s32 %v947, %v949
    %v951 = vrot.slane %v935, %v950
    %v953 = vunpack.c.l.s4 1966171168
    %v954 = vunpack.c.0.s8 %v953
    %v955 = vlaneseq
    %v956 = vshrl.u32 %v955, 7
    %v957 = vsub.s32 %v954, %v956
    %v958 = vrot.slane %v942, %v957
    %v960 = vunpack.c.l.s4 1966171168
    %v961 = vunpack.c.0.s8 %v960
    %v962 = vlaneseq
    %v963 = vshrl.u32 %v962, 7
    %v964 = vsub.s32 %v961, %v963
    %v965 = vrot.slane %v943, %v964
    %v967 = vunpack.c.l.s4 1966171168
    %v968 = vunpack.c.0.s8 %v967
    %v969 = vlaneseq
    %v970 = vshrl.u32 %v969, 7
    %v971 = vsub.s32 %v968, %v970
    %v972 = vrot.slane %v944, %v971
    %v973 = vcombine.high %v951, %v951
    %v974 = vcombine.high %v958, %v958
    %v975 = vcombine.high %v965, %v965
    %v976 = vcombine.high %v972, %v972
    %985 = vst [vmem:[#allocation6] sm:$0x1] %v951
    %986 = vst [vmem:[#allocation6 + $0x1] sm:$0x1] %v965
    %987 = vst [vmem:[#allocation6 + $0x2] sm:$0x1] %v973
    %988 = vst [vmem:[#allocation6 + $0x3] sm:$0x1] %v975
    %989 = vst [vmem:[#allocation6 + $0x4] sm:$0x1] %v958
    %990 = vst [vmem:[#allocation6 + $0x5] sm:$0x1] %v972
    %991 = vst [vmem:[#allocation6 + $0x6] sm:$0x1] %v974
    %992 = vst [vmem:[#allocation6 + $0x7] sm:$0x1] %v976
    // Predicated region
    $region22: #{linear_head_pallas.1} parent=1 // pred_check
      _
    $region23: #{linear_head_pallas.1} parent=1 // pred_check_branch
      %994 = sbr.rel (0) target = $region25
    $region24: #{linear_head_pallas.1} parent=1 // pred_region
      // Predicated region
      $region26: #{linear_head_pallas.1} parent=24 // pred_check
        _
      $region27: #{linear_head_pallas.1} parent=24 // pred_check_branch
        %996 = sbr.rel (0) target = $region29
      $region28: #{linear_head_pallas.1} parent=24 // pred_region
        // Predicated region
        $region30: #{linear_head_pallas.1} parent=28 // pred_check
          _
        $region31: #{linear_head_pallas.1} parent=28 // pred_check_branch
          %998 = sbr.rel target = $region33
        $region32: #{linear_head_pallas.1} parent=28 // pred_region
          // Predicated region
          $region45: #{linear_head_pallas.1} parent=32 // pred_check
            _
          $region46: #{linear_head_pallas.1} parent=32 // pred_check_branch
            %1014 = sbr.rel (0) target = $region48
          $region47: #{linear_head_pallas.1} parent=32 // pred_region
            %s1016 = ssub.s32 2, 1
            loop: start=0, step=1, limit=1
            $region49: #{linear_head_pallas.1} parent=47 // loop_pre_header
              _
            $region50: #{linear_head_pallas.1} parent=47 // loop_header
              %s1018 = sphi 0, %s1022
              %p1019 = scmp.ge.s32.totalorder %s1018, 1
              %s1023 = sphi [#allocation6], [#allocation6]
              %s1024 = sphi %s3, %s3
            $region51: #{linear_head_pallas.1} parent=47 // loop_header_branch
              %1021 = sbr.rel (%p1019) target = $region55
            $region52: #{linear_head_pallas.1} parent=47 // loop_body
              %v1025 = vld [vmem:[%s1023] sm:%s1016]
              %1026 = vst [vmem:[%s1024] sm:%s1016] %v1025
            $region53: #{linear_head_pallas.1} parent=47 // loop_footer
              %s1022 = sadd.s32 1, %s1018
            $region54: #{linear_head_pallas.1} parent=47 // loop_footer_branch
              %1017 = sbr.rel target = $region50
            $region55: #{linear_head_pallas.1} parent=47 // loop_exit
              _
          $region48: #{linear_head_pallas.1} parent=32 // pred_fallthru
            _
        $region33: #{linear_head_pallas.1} parent=28 // pred_fallthru
          _
        // Predicated region
        $region34: #{linear_head_pallas.1} parent=28 // pred_check
          _
        $region35: #{linear_head_pallas.1} parent=28 // pred_check_branch
          %1000 = sbr.rel (0) target = $region37
        $region36: #{linear_head_pallas.1} parent=28 // pred_region
          %s1002 = ssub.s32 2, 1
          loop: start=0, step=1, limit=1
          $region38: #{linear_head_pallas.1} parent=36 // loop_pre_header
            _
          $region39: #{linear_head_pallas.1} parent=36 // loop_header
            %s1004 = sphi 0, %s1008
            %p1005 = scmp.ge.s32.totalorder %s1004, 1
            %s1009 = sphi [#allocation6], [#allocation6]
            %s1010 = sphi %s3, %s3
          $region40: #{linear_head_pallas.1} parent=36 // loop_header_branch
            %1007 = sbr.rel (%p1005) target = $region44
          $region41: #{linear_head_pallas.1} parent=36 // loop_body
            %v1011 = vld [vmem:[%s1009] sm:%s1002]
            %1012 = vst [vmem:[%s1010] sm:%s1002] %v1011
          $region42: #{linear_head_pallas.1} parent=36 // loop_footer
            %s1008 = sadd.s32 1, %s1004
          $region43: #{linear_head_pallas.1} parent=36 // loop_footer_branch
            %1003 = sbr.rel target = $region39
          $region44: #{linear_head_pallas.1} parent=36 // loop_exit
            _
        $region37: #{linear_head_pallas.1} parent=28 // pred_fallthru
          _
      $region29: #{linear_head_pallas.1} parent=24 // pred_fallthru
        _
      %1027 = vnop
    $region25: #{linear_head_pallas.1} parent=1 // pred_fallthru
      _
    // Predicated region
    $region56: #{linear_head_pallas.1} parent=1 // pred_check
      _
    $region57: #{linear_head_pallas.1} parent=1 // pred_check_branch
      %1029 = sbr.rel (0) target = $region59
    $region58: #{linear_head_pallas.1} parent=1 // pred_region
      _
    $region59: #{linear_head_pallas.1} parent=1 // pred_fallthru
      _
    %1030 = vsyncpa [#allocation3], 1
    %1031 = vsyncpa [#allocation5], 1

</llo_original>
